<compile_context>
chip_gen: v7x
topology: tpu7x:2x2x1
jax: 0.10.0
libtpu: 0.0.40
codegen_flags: <defaults>
</compile_context>

<pallas_src>
import functools

import jax
import jax.numpy as jnp
from jax.experimental import pallas as pl
from jax.experimental.pallas import tpu as pltpu

_LANE = 128
# Conservative accounting budget for the double-buffered in/out tiles plus
# f32 intermediates (fits comfortably under the scoped limit below on all of
# v5e / v6e / v7x; v7x has only 64 MiB physical VMEM per core).
_VMEM_TILE_BUDGET = 16 * 1024 * 1024
_VMEM_LIMIT_BYTES = 40 * 1024 * 1024


def _round_up(a, b):
    return ((a + b - 1) // b) * b


def _layernorm_kernel(x_ref, w_ref, b_ref, o_ref, *, eps, valid_h):
    """One tile: (row_tile, Hp). Normalize each row over its first `valid_h` cols."""
    x = x_ref[...].astype(jnp.float32)                       # (T, Hp), f32 accum
    hp = x.shape[-1]
    inv_h = jnp.float32(1.0 / valid_h)

    # Padded columns of x are zero, so a plain sum / valid_h gives the mean.
    u = jnp.sum(x, axis=-1, keepdims=True) * inv_h           # row mean
    d = x - u
    if valid_h != hp:
        # Mask padded columns out of the variance (they'd contribute (-u)^2).
        mask = jax.lax.broadcasted_iota(jnp.int32, x.shape, 1) < valid_h
        d = jnp.where(mask, d, 0.0)
    s = jnp.sum(d * d, axis=-1, keepdims=True) * inv_h       # biased variance
    inv = jax.lax.rsqrt(s + eps)                             # eps inside sqrt

    # w_ref / b_ref are already f32 (1, Hp); padded cols of w/b are zero.
    o_ref[...] = (d * inv * w_ref[...] + b_ref[...]).astype(o_ref.dtype)


def layer_norm(x, weight, bias, eps=1e-12):
    """x: [..., H]; weight, bias: [H]. Returns same shape/dtype as x."""
    orig_shape = x.shape
    H = orig_shape[-1]
    x2 = x.reshape(-1, H)
    R = x2.shape[0]

    # --- Lane-dense last dim: pad H up to a multiple of 128. ---
    Hp = _round_up(H, _LANE)

    # --- Row tile sized against the VMEM budget. ---
    itemsize = jnp.dtype(x.dtype).itemsize
    sublane = {4: 8, 2: 16, 1: 32}.get(itemsize, 8)
    # per-row bytes: double-buffered input + output, plus ~3 f32 temps headroom
    per_row = Hp * (4 * itemsize + 12)
    row_tile_cap = max(sublane, (_VMEM_TILE_BUDGET // per_row) // sublane * sublane)

    grid_n = pl.cdiv(R, row_tile_cap)
    row_tile = _round_up(pl.cdiv(R, grid_n), sublane)
    Rp = grid_n * row_tile

    # --- Pad rows/cols only when needed (padded rows/cols are sliced off). ---
    if (Rp, Hp) != (R, H):
        x2 = jnp.pad(x2, ((0, Rp - R), (0, Hp - H)))

    w2 = weight.astype(jnp.float32)
    b2 = bias.astype(jnp.float32)
    if Hp != H:
        w2 = jnp.pad(w2, (0, Hp - H))
        b2 = jnp.pad(b2, (0, Hp - H))
    w2 = w2.reshape(1, Hp)
    b2 = b2.reshape(1, Hp)

    kernel = functools.partial(_layernorm_kernel, eps=float(eps), valid_h=H)

    out = pl.pallas_call(
        kernel,
        out_shape=jax.ShapeDtypeStruct((Rp, Hp), x.dtype),
        grid_spec=pl.GridSpec(
            grid=(grid_n,),
            in_specs=[
                pl.BlockSpec((row_tile, Hp), lambda i: (i, 0)),
                pl.BlockSpec((1, Hp), lambda i: (0, 0)),  # weight: resident
                pl.BlockSpec((1, Hp), lambda i: (0, 0)),  # bias: resident
            ],
            out_specs=pl.BlockSpec((row_tile, Hp), lambda i: (i, 0)),
        ),
        compiler_params=pltpu.CompilerParams(
            dimension_semantics=("parallel",),   # lets v7x split tiles across its 2 TCs
            vmem_limit_bytes=_VMEM_LIMIT_BYTES,
        ),
    )(x2, w2, b2)

    if (Rp, Hp) != (R, H):
        out = out[:R, :H]
    return out.reshape(orig_shape)


if __name__ == "__main__":
    key = jax.random.PRNGKey(0)
    kx, kw, kb = jax.random.split(key, 3)

    B, S, H = 2, 8, 32
    x = jax.random.normal(kx, (B, S, H), dtype=jnp.float32)
    # Module initializes weight=ones, bias=zeros; use non-trivial (deterministic)
    # values here so the affine path is actually exercised.
    weight = 1.0 + 0.1 * jax.random.normal(kw, (H,), dtype=jnp.float32)
    bias = 0.1 * jax.random.normal(kb, (H,), dtype=jnp.float32)

    y = layer_norm(x, weight, bias, eps=1e-12)
    y = jax.block_until_ready(y)

    # Reference check in plain JAX (same math as the PyTorch module).
    u = jnp.mean(x, axis=-1, keepdims=True)
    s = jnp.mean((x - u) ** 2, axis=-1, keepdims=True)
    ref = weight * ((x - u) / jnp.sqrt(s + 1e-12)) + bias
    assert jnp.allclose(y, ref, atol=1e-5, rtol=1e-5), "mismatch vs reference"

    print("KERNEL_OK")
</pallas_src>

<mosaic_0001>
module attributes {stable_mosaic.version = 11 : i64} {
  func.func @_layernorm_kernel(%arg0: i32, %arg1: memref<16x128xf32, #tpu.memory_space<vmem>>, %arg2: memref<1x128xf32, #tpu.memory_space<vmem>>, %arg3: memref<1x128xf32, #tpu.memory_space<vmem>>, %arg4: memref<16x128xf32, #tpu.memory_space<vmem>>) attributes {dimension_semantics = [#tpu.dimension_semantics<parallel>], iteration_bounds = array<i64: 1>, scalar_prefetch = 0 : i64, scratch_operands = 0 : i64, tpu.core_type = #tpu.core_type<tc>, window_params = [{transform_indices = @transform_0, window_bounds = array<i64: 16, 128>}, {pipeline_mode = #tpu.pipeline_mode<synchronous>, transform_indices = @transform_1, window_bounds = array<i64: 1, 128>}, {pipeline_mode = #tpu.pipeline_mode<synchronous>, transform_indices = @transform_2, window_bounds = array<i64: 1, 128>}, {transform_indices = @transform_3, window_bounds = array<i64: 16, 128>}]} {
    %c0 = arith.constant 0 : index
    %c0_0 = arith.constant 0 : index
    %0 = vector.load %arg1[%c0, %c0_0] : memref<16x128xf32, #tpu.memory_space<vmem>>, vector<16x128xf32>
    %cst = arith.constant dense<0.000000e+00> : vector<16xf32>
    %1 = vector.multi_reduction <add>, %0, %cst [1] : vector<16x128xf32> to vector<16xf32>
    %2 = vector.shape_cast %1 : vector<16xf32> to vector<16x1xf32>
    %cst_1 = arith.constant 3.125000e-02 : f32
    %3 = vector.broadcast %cst_1 : f32 to vector<16x1xf32>
    %4 = arith.mulf %2, %3 : vector<16x1xf32>
    %5 = vector.broadcast %4 : vector<16x1xf32> to vector<16x128xf32>
    %6 = arith.subf %0, %5 : vector<16x128xf32>
    %7 = tpu.iota {dimensions = array<i32: 1>} : vector<16x128xi32>
    %c32_i32 = arith.constant 32 : i32
    %8 = vector.broadcast %c32_i32 : i32 to vector<16x128xi32>
    %9 = arith.cmpi slt, %7, %8 : vector<16x128xi32>
    %cst_2 = arith.constant 0.000000e+00 : f32
    %10 = vector.broadcast %cst_2 : f32 to vector<16x128xf32>
    %11 = arith.select %9, %6, %10 : vector<16x128xi1>, vector<16x128xf32>
    %12 = arith.mulf %11, %11 : vector<16x128xf32>
    %cst_3 = arith.constant dense<0.000000e+00> : vector<16xf32>
    %13 = vector.multi_reduction <add>, %12, %cst_3 [1] : vector<16x128xf32> to vector<16xf32>
    %14 = vector.shape_cast %13 : vector<16xf32> to vector<16x1xf32>
    %cst_4 = arith.constant 3.125000e-02 : f32
    %15 = vector.broadcast %cst_4 : f32 to vector<16x1xf32>
    %16 = arith.mulf %14, %15 : vector<16x1xf32>
    %cst_5 = arith.constant 9.99999996E-13 : f32
    %17 = vector.broadcast %cst_5 : f32 to vector<16x1xf32>
    %18 = arith.addf %16, %17 : vector<16x1xf32>
    %19 = math.rsqrt %18 : vector<16x1xf32>
    %20 = vector.broadcast %19 : vector<16x1xf32> to vector<16x128xf32>
    %21 = arith.mulf %11, %20 : vector<16x128xf32>
    %c0_6 = arith.constant 0 : index
    %c0_7 = arith.constant 0 : index
    %22 = vector.load %arg2[%c0_6, %c0_7] : memref<1x128xf32, #tpu.memory_space<vmem>>, vector<1x128xf32>
    %23 = vector.broadcast %22 : vector<1x128xf32> to vector<16x128xf32>
    %24 = arith.mulf %21, %23 : vector<16x128xf32>
    %c0_8 = arith.constant 0 : index
    %c0_9 = arith.constant 0 : index
    %25 = vector.load %arg3[%c0_8, %c0_9] : memref<1x128xf32, #tpu.memory_space<vmem>>, vector<1x128xf32>
    %26 = vector.broadcast %25 : vector<1x128xf32> to vector<16x128xf32>
    %27 = arith.addf %24, %26 : vector<16x128xf32>
    %c0_10 = arith.constant 0 : index
    %c0_11 = arith.constant 0 : index
    %28 = vector.load %arg4[%c0_10, %c0_11] : memref<16x128xf32, #tpu.memory_space<vmem>>, vector<16x128xf32>
    tpu.vector_store %arg4[%c0_10, %c0_11], %27 {strides = array<i32>} : memref<16x128xf32, #tpu.memory_space<vmem>>, vector<16x128xf32>,
    return
  }
  func.func @transform_0(%arg0: i32) -> (i32, i32) {
    %c0_i32 = arith.constant 0 : i32
    %c0_i32_0 = arith.constant 0 : i32
    return %arg0, %c0_i32 : i32, i32
  }
  func.func @transform_1(%arg0: i32) -> (i32, i32) {
    %c0_i32 = arith.constant 0 : i32
    %c0_i32_0 = arith.constant 0 : i32
    %c0_i32_1 = arith.constant 0 : i32
    return %c0_i32, %c0_i32_0 : i32, i32
  }
  func.func @transform_2(%arg0: i32) -> (i32, i32) {
    %c0_i32 = arith.constant 0 : i32
    %c0_i32_0 = arith.constant 0 : i32
    %c0_i32_1 = arith.constant 0 : i32
    return %c0_i32, %c0_i32_0 : i32, i32
  }
  func.func @transform_3(%arg0: i32) -> (i32, i32) {
    %c0_i32 = arith.constant 0 : i32
    %c0_i32_0 = arith.constant 0 : i32
    return %arg0, %c0_i32 : i32, i32
  }
}

</mosaic_0001>

<llo_original>
// kernel: tpu_custom_call.1
$region0: #{tpu_custom_call.1}
  #allocation0 [shape = 'u32[]', space=smem, size = 0x4, offset = 0x4, fixed_abs, tag = 'smem constant byte address 0x4 - core index']
  #allocation1 [shape = 'u32[144,128]{1,0:T(1,128)}', space=vmem, size = 0x12000, scoped, tag = 'internal scratch']
  %s0 = inlined_call_operand.hbm [shape: f32[16,128], index: 0, kind: input, shape index: {}]
  %s1 = inlined_call_operand.vmem [shape: f32[1,128], index: 1, kind: input, shape index: {}]
  %s2 = inlined_call_operand.vmem [shape: f32[1,128], index: 2, kind: input, shape index: {}]
  %s3 = inlined_call_operand.hbm [shape: f32[16,128], index: 3, kind: output, shape index: {}]
  %s4 = sld [smem:[#allocation0]]
  $region26: #{tpu_custom_call.1} parent=0
    _
  %s6 = ssub.s32 1, %s4
  %s7 = scalar_select 0, %s6, %s4
  $region1: #{tpu_custom_call.1} parent=0
    #allocation2 [shape = 'u8[8192]{0}', space=vmem, size = 0x2000, scoped, tag = 'input window, operand 0, single buffered']
    #allocation3 [shape = 's32[1]{0}', space=sflag, size = 0x4, scoped, tag = 'scoped memory for tpu_custom_call.1']
    #allocation4 [shape = 's32[1]{0}', space=sflag, size = 0x4, scoped, tag = 'scoped memory for tpu_custom_call.1']
    #allocation5 [shape = 'u8[8192]{0}', space=vmem, size = 0x2000, scoped, tag = 'output window, operand 0, single buffered']
    %8 = vsyncpa [#allocation3], 0
    %9 = vsyncpa [#allocation4], 0
    // Predicated region
    $region2: #{tpu_custom_call.1} parent=1 // pred_check
      _
    $region3: #{tpu_custom_call.1} parent=1 // pred_check_branch
      %11 = sbr.rel (0) target = $region5
    $region4: #{tpu_custom_call.1} parent=1 // pred_region
      %s13 = ssub.s32 256, 256
      %14 = vsyncadd [#allocation3], %s13
      %s15 = sshll.u32 [#allocation2], 4
      %s16 = int_to_ptr.vmem [resolvable:$true] %s15
      %21 = dma.hbm_to_vmem [thread:$0]  %s0, 256, %s16, [#allocation3], 128, 128, 8
    $region5: #{tpu_custom_call.1} parent=1 // pred_fallthru
      _
    // Predicated region
    $region6: #{tpu_custom_call.1} parent=1 // pred_check
      _
    $region7: #{tpu_custom_call.1} parent=1 // pred_check_branch
      %23 = sbr.rel (0) target = $region9
    $region8: #{tpu_custom_call.1} parent=1 // pred_region
      _
    $region9: #{tpu_custom_call.1} parent=1 // pred_fallthru
      _
    // Predicated region
    $region10: #{tpu_custom_call.1} parent=1 // pred_check
      _
    $region11: #{tpu_custom_call.1} parent=1 // pred_check_branch
      %25 = sbr.rel (0) target = $region13
    $region12: #{tpu_custom_call.1} parent=1 // pred_region
      _
    $region13: #{tpu_custom_call.1} parent=1 // pred_fallthru
      _
    // Predicated region
    $region14: #{tpu_custom_call.1} parent=1 // pred_check
      _
    $region15: #{tpu_custom_call.1} parent=1 // pred_check_branch
      %27 = sbr.rel (0) target = $region17
    $region16: #{tpu_custom_call.1} parent=1 // pred_region
      %28 = dma.done [#allocation3], 256
    $region17: #{tpu_custom_call.1} parent=1 // pred_fallthru
      _
    %v29 = vld [vmem:[#allocation2] sm:$0xff]
    %v30 = vld [vmem:[#allocation2 + $0x8] sm:$0xff]
    %31 = vadd.xlane.f32.xlu0 %v29
    %v32 = vpop.xlane.xlu0 %31
    %33 = vadd.xlane.f32.xlu0 %v30
    %v34 = vpop.xlane.xlu0 %33
    %v35 = vmul.f32 %v32, 0.03125
    %v36 = vmul.f32 %v34, 0.03125
    %v37 = vsub.f32 %v29, %v35
    %v38 = vsub.f32 %v30, %v36
    %v39 = vlaneseq
    %v40 = vand.u32 %v39, 127
    %vm41 = vcmp.lt.s32.totalorder %v40, 32
    %v42 = vsel %vm41, %v37, 0.0
    %v43 = vsel %vm41, %v38, 0.0
    %v44 = vmul.f32 %v42, %v42
    %v45 = vmul.f32 %v43, %v43
    %46 = vadd.xlane.f32.xlu0 %v44
    %v47 = vpop.xlane.xlu0 %46
    %48 = vadd.xlane.f32.xlu0 %v45
    %v49 = vpop.xlane.xlu0 %48
    %v50 = vmul.f32 %v47, 0.03125
    %v51 = vmul.f32 %v49, 0.03125
    %v52 = vadd.f32 %v50, 1e-12
    %v53 = vadd.f32 %v51, 1e-12
    %v54 = vrsqrt.pop %v52
    %v55 = vrsqrt.pop %v53
    %v56 = vmul.f32 %v42, %v54
    %v57 = vmul.f32 %v43, %v55
    %v58 = vld [vmem:[%s1] sm:$0x1]
    %v60 = vlaneseq
    %v61 = vshrl.u32 %v60, 7
    %v62 = vsub.s32 0, %v61
    %v63 = vrot.slane %v58, %v62
    %v65 = vmul.f32 %v56, %v63
    %v66 = vmul.f32 %v57, %v63
    %v67 = vld [vmem:[%s2] sm:$0x1]
    %v69 = vlaneseq
    %v70 = vshrl.u32 %v69, 7
    %v71 = vsub.s32 0, %v70
    %v72 = vrot.slane %v67, %v71
    %v74 = vadd.f32 %v65, %v72
    %v75 = vadd.f32 %v66, %v72
    %76 = vst [vmem:[#allocation5] sm:$0xff] %v74
    %77 = vst [vmem:[#allocation5 + $0x8] sm:$0xff] %v75
    // Predicated region
    $region18: #{tpu_custom_call.1} parent=1 // pred_check
      _
    $region19: #{tpu_custom_call.1} parent=1 // pred_check_branch
      %79 = sbr.rel (0) target = $region21
    $region20: #{tpu_custom_call.1} parent=1 // pred_region
      %s81 = ssub.s32 256, 256
      %82 = vsyncadd [#allocation4], %s81
      %s83 = sshll.u32 [#allocation5], 4
      %s84 = int_to_ptr.vmem [resolvable:$true] %s83
      %89 = dma.vmem_to_hbm [thread:$0]  %s84, 256, %s3, [#allocation4], 128, 128, 8
    $region21: #{tpu_custom_call.1} parent=1 // pred_fallthru
      _
    // Predicated region
    $region22: #{tpu_custom_call.1} parent=1 // pred_check
      _
    $region23: #{tpu_custom_call.1} parent=1 // pred_check_branch
      %91 = sbr.rel (0) target = $region25
    $region24: #{tpu_custom_call.1} parent=1 // pred_region
      %92 = dma.done [#allocation4], 256
    $region25: #{tpu_custom_call.1} parent=1 // pred_fallthru
      _
    %93 = vsyncpa [#allocation3], 1
    %94 = vsyncpa [#allocation4], 1

</llo_original>
